<compile_context>
chip_gen: v7x
topology: tpu7x:2x2x1
jax: 0.10.0
libtpu: 0.0.40
codegen_flags: <defaults>
</compile_context>

<pallas_src>
import jax
import jax.numpy as jnp
from jax.experimental import pallas as pl
from jax.experimental.pallas import tpu as pltpu


# ----------------------------------------------------------------------------
# kernel: fused   outT = W2^T @ relu(W1^T @ inpT + b1) + b2   (batch on lanes)
# ----------------------------------------------------------------------------
def _teammate_kernel(inpT_ref, w1T_ref, b1_ref, w2T_ref, b2_ref, outT_ref):
    # (hidden, K) @ (K, block_rows) -> (hidden, block_rows), f32 accumulation
    hidT = jnp.dot(w1T_ref[...], inpT_ref[...],
                   preferred_element_type=jnp.float32)
    hidT = jnp.maximum(hidT + b1_ref[...], 0.0)          # bias + ReLU in f32
    # (n_act, hidden) @ (hidden, block_rows) -> (n_act, block_rows)
    outT = jnp.dot(w2T_ref[...], hidT.astype(w2T_ref.dtype),
                   preferred_element_type=jnp.float32) + b2_ref[...]
    outT_ref[...] = outT.astype(outT_ref.dtype)


# ----------------------------------------------------------------------------
# wrapper
# ----------------------------------------------------------------------------
def _round_up(x, m):
    return ((x + m - 1) // m) * m


def teammate_forward(params, h, dj, *, compute_dtype=jnp.bfloat16,
                     block_rows_cap=4096):
    """h: (..., rnn_hidden_dim), dj: (..., n_agents) -> (..., n_actions)."""
    lead = h.shape[:-1]
    H = h.shape[-1]
    A = dj.shape[-1]
    K = H + A
    hidden = params["w1T"].shape[0]
    n_act = params["w2T"].shape[0]

    h2 = h.reshape(-1, H)
    dj2 = dj.reshape(-1, A)
    N = h2.shape[0]

    # Lane-dense tile over the batch axis: multiple of 128, capped, and sized
    # so there are >= 2 grid steps whenever N > 128 (v7x megacore sharding).
    block_rows = min(block_rows_cap, max(128, _round_up(pl.cdiv(N, 2), 128)))
    grid_n = pl.cdiv(N, block_rows)
    n_pad = grid_n * block_rows

    # Transposed, concatenated, (optionally) bf16 input slab: (K, N_pad).
    inpT = jnp.concatenate([h2, dj2], axis=-1).T.astype(compute_dtype)
    if n_pad != N:
        inpT = jnp.pad(inpT, ((0, 0), (0, n_pad - N)))

    w1T = params["w1T"].astype(compute_dtype)   # (hidden, K)   resident
    w2T = params["w2T"].astype(compute_dtype)   # (n_act, hidden) resident
    b1 = params["b1"].astype(jnp.float32)       # (hidden, 1)
    b2 = params["b2"].astype(jnp.float32)       # (n_act, 1)

    outT = pl.pallas_call(
        _teammate_kernel,
        grid=(grid_n,),
        in_specs=[
            pl.BlockSpec((K, block_rows), lambda i: (0, i)),      # inpT tile
            pl.BlockSpec((hidden, K), lambda i: (0, 0)),          # W1^T resident
            pl.BlockSpec((hidden, 1), lambda i: (0, 0)),          # b1   resident
            pl.BlockSpec((n_act, hidden), lambda i: (0, 0)),      # W2^T resident
            pl.BlockSpec((n_act, 1), lambda i: (0, 0)),           # b2   resident
        ],
        out_specs=pl.BlockSpec((n_act, block_rows), lambda i: (0, i)),
        out_shape=jax.ShapeDtypeStruct((n_act, n_pad), jnp.float32),
        compiler_params=pltpu.CompilerParams(
            dimension_semantics=("parallel",),
            vmem_limit_bytes=32 * 1024 * 1024),
    )(inpT, w1T, b1, w2T, b2)

    out = outT[:, :N].T                          # back to (N, n_act)
    return out.reshape(*lead, n_act)


# ----------------------------------------------------------------------------
# parameter init (PyTorch nn.Linear default: uniform(-1/sqrt(fan_in), +)).
# Weights stored transposed for the lane-dense orientation:
#   w1T: (hidden_dim, rnn_hidden_dim + n_agents),  w2T: (n_actions, hidden_dim)
# ----------------------------------------------------------------------------
def init_params(key, args):
    H, A = args.rnn_hidden_dim, args.n_agents
    Hd, nA = args.hidden_dim, args.n_actions
    k1, k2, k3, k4 = jax.random.split(key, 4)

    def lin(kw, kb, fan_in, fan_out):
        bound = 1.0 / float(fan_in) ** 0.5
        w = jax.random.uniform(kw, (fan_in, fan_out), jnp.float32, -bound, bound)
        b = jax.random.uniform(kb, (fan_out, 1), jnp.float32, -bound, bound)
        return w, b

    w1, b1 = lin(k1, k2, H + A, Hd)   # first Linear acting on cat([h, dj])
    w2, b2 = lin(k3, k4, Hd, nA)
    return {"w1T": w1.T, "b1": b1, "w2T": w2.T, "b2": b2}


# ----------------------------------------------------------------------------
# main
# ----------------------------------------------------------------------------
class Args:
    n_agents = 4
    n_actions = 8
    rnn_hidden_dim = 32
    hidden_dim = 32


if __name__ == "__main__":
    args = Args()
    episode_num = 2                      # RTWAgent-style usage: (E, A, A, ...) batch
    A, H = args.n_agents, args.rnn_hidden_dim

    key = jax.random.PRNGKey(0)
    kp, kh, kd = jax.random.split(key, 3)

    params = init_params(kp, args)
    h = jax.random.normal(kh, (episode_num, A, A, H), jnp.float32)
    dj = jax.random.normal(kd, (episode_num, A, A, A), jnp.float32)

    # default path: bf16 MXU operands, f32 accumulation / output
    action_j = teammate_forward(params, h, dj)
    jax.block_until_ready(action_j)
    assert action_j.shape == (episode_num, A, A, args.n_actions)

    # reference: plain JAX version of the PyTorch forward (cat -> Linear -> ReLU -> Linear)
    w1 = params["w1T"].T                  # (H+A, hidden)
    w2 = params["w2T"].T                  # (hidden, n_act)
    inp = jnp.concatenate([h, dj], axis=-1).reshape(-1, H + A)
    hid = jnp.maximum(
        jnp.dot(inp, w1, preferred_element_type=jnp.float32,
                precision=jax.lax.Precision.HIGHEST) + params["b1"].T, 0.0)
    ref = (jnp.dot(hid, w2, preferred_element_type=jnp.float32,
                   precision=jax.lax.Precision.HIGHEST) + params["b2"].T)
    ref = ref.reshape(episode_num, A, A, args.n_actions)

    # bf16 path: loose tolerance vs exact-f32 reference
    err_bf16 = float(jnp.max(jnp.abs(action_j - ref)))
    assert jnp.allclose(action_j, ref, atol=5e-2, rtol=5e-2), err_bf16

    # f32 path: tight tolerance vs exact-f32 reference
    action_f32 = teammate_forward(params, h, dj, compute_dtype=jnp.float32)
    jax.block_until_ready(action_f32)
    err_f32 = float(jnp.max(jnp.abs(action_f32 - ref)))
    assert jnp.allclose(action_f32, ref, atol=1e-4, rtol=1e-4), err_f32

    print("KERNEL_OK")
</pallas_src>

<mosaic_0001>
module attributes {stable_mosaic.version = 11 : i64} {
  func.func @_teammate_kernel(%arg0: i32, %arg1: memref<36x128xbf16, #tpu.memory_space<vmem>>, %arg2: memref<32x36xbf16, #tpu.memory_space<vmem>>, %arg3: memref<32x1xf32, #tpu.memory_space<vmem>>, %arg4: memref<8x32xbf16, #tpu.memory_space<vmem>>, %arg5: memref<8x1xf32, #tpu.memory_space<vmem>>, %arg6: memref<8x128xf32, #tpu.memory_space<vmem>>) attributes {dimension_semantics = [#tpu.dimension_semantics<parallel>], iteration_bounds = array<i64: 1>, scalar_prefetch = 0 : i64, scratch_operands = 0 : i64, tpu.core_type = #tpu.core_type<tc>, window_params = [{transform_indices = @transform_0, window_bounds = array<i64: 36, 128>}, {pipeline_mode = #tpu.pipeline_mode<synchronous>, transform_indices = @transform_1, window_bounds = array<i64: 32, 36>}, {pipeline_mode = #tpu.pipeline_mode<synchronous>, transform_indices = @transform_2, window_bounds = array<i64: 32, 1>}, {pipeline_mode = #tpu.pipeline_mode<synchronous>, transform_indices = @transform_3, window_bounds = array<i64: 8, 32>}, {pipeline_mode = #tpu.pipeline_mode<synchronous>, transform_indices = @transform_4, window_bounds = array<i64: 8, 1>}, {transform_indices = @transform_5, window_bounds = array<i64: 8, 128>}]} {
    %c0 = arith.constant 0 : index
    %c0_0 = arith.constant 0 : index
    %0 = vector.load %arg2[%c0, %c0_0] : memref<32x36xbf16, #tpu.memory_space<vmem>>, vector<32x36xbf16>
    %c0_1 = arith.constant 0 : index
    %c0_2 = arith.constant 0 : index
    %1 = vector.load %arg1[%c0_1, %c0_2] : memref<36x128xbf16, #tpu.memory_space<vmem>>, vector<36x128xbf16>
    %cst = arith.constant dense<0.000000e+00> : vector<32x128xf32>
    %2 = tpu.matmul %0, %1, %cst {dimension_numbers = #tpu.dot_dimension_numbers<[1], [0], [0], [1], [0, 0, 1, 1], [], []>} : vector<32x36xbf16>, vector<36x128xbf16>, vector<32x128xf32> -> vector<32x128xf32>
    %c0_3 = arith.constant 0 : index
    %c0_4 = arith.constant 0 : index
    %3 = vector.load %arg3[%c0_3, %c0_4] : memref<32x1xf32, #tpu.memory_space<vmem>>, vector<32x1xf32>
    %4 = vector.broadcast %3 : vector<32x1xf32> to vector<32x128xf32>
    %5 = arith.addf %2, %4 : vector<32x128xf32>
    %cst_5 = arith.constant 0.000000e+00 : f32
    %6 = vector.broadcast %cst_5 : f32 to vector<32x128xf32>
    %7 = arith.maximumf %5, %6 : vector<32x128xf32>
    %c0_6 = arith.constant 0 : index
    %c0_7 = arith.constant 0 : index
    %8 = vector.load %arg4[%c0_6, %c0_7] : memref<8x32xbf16, #tpu.memory_space<vmem>>, vector<8x32xbf16>
    %9 = arith.truncf %7 : vector<32x128xf32> to vector<32x128xbf16>
    %cst_8 = arith.constant dense<0.000000e+00> : vector<8x128xf32>
    %10 = tpu.matmul %8, %9, %cst_8 {dimension_numbers = #tpu.dot_dimension_numbers<[1], [0], [0], [1], [0, 0, 1, 1], [], []>} : vector<8x32xbf16>, vector<32x128xbf16>, vector<8x128xf32> -> vector<8x128xf32>
    %c0_9 = arith.constant 0 : index
    %c0_10 = arith.constant 0 : index
    %11 = vector.load %arg5[%c0_9, %c0_10] : memref<8x1xf32, #tpu.memory_space<vmem>>, vector<8x1xf32>
    %12 = vector.broadcast %11 : vector<8x1xf32> to vector<8x128xf32>
    %13 = arith.addf %10, %12 : vector<8x128xf32>
    %c0_11 = arith.constant 0 : index
    %c0_12 = arith.constant 0 : index
    %14 = vector.load %arg6[%c0_11, %c0_12] : memref<8x128xf32, #tpu.memory_space<vmem>>, vector<8x128xf32>
    tpu.vector_store %arg6[%c0_11, %c0_12], %13 {strides = array<i32>} : memref<8x128xf32, #tpu.memory_space<vmem>>, vector<8x128xf32>,
    return
  }
  func.func @transform_0(%arg0: i32) -> (i32, i32) {
    %c0_i32 = arith.constant 0 : i32
    %c0_i32_0 = arith.constant 0 : i32
    return %c0_i32, %arg0 : i32, i32
  }
  func.func @transform_1(%arg0: i32) -> (i32, i32) {
    %c0_i32 = arith.constant 0 : i32
    %c0_i32_0 = arith.constant 0 : i32
    %c0_i32_1 = arith.constant 0 : i32
    return %c0_i32, %c0_i32_0 : i32, i32
  }
  func.func @transform_2(%arg0: i32) -> (i32, i32) {
    %c0_i32 = arith.constant 0 : i32
    %c0_i32_0 = arith.constant 0 : i32
    %c0_i32_1 = arith.constant 0 : i32
    return %c0_i32, %c0_i32_0 : i32, i32
  }
  func.func @transform_3(%arg0: i32) -> (i32, i32) {
    %c0_i32 = arith.constant 0 : i32
    %c0_i32_0 = arith.constant 0 : i32
    %c0_i32_1 = arith.constant 0 : i32
    return %c0_i32, %c0_i32_0 : i32, i32
  }
  func.func @transform_4(%arg0: i32) -> (i32, i32) {
    %c0_i32 = arith.constant 0 : i32
    %c0_i32_0 = arith.constant 0 : i32
    %c0_i32_1 = arith.constant 0 : i32
    return %c0_i32, %c0_i32_0 : i32, i32
  }
  func.func @transform_5(%arg0: i32) -> (i32, i32) {
    %c0_i32 = arith.constant 0 : i32
    %c0_i32_0 = arith.constant 0 : i32
    return %c0_i32, %arg0 : i32, i32
  }
}

</mosaic_0001>

<llo_original>
// kernel: tpu_custom_call.1
$region0: #{tpu_custom_call.1}
  #allocation0 [shape = 'u32[]', space=smem, size = 0x4, offset = 0x4, fixed_abs, tag = 'smem constant byte address 0x4 - core index']
  #allocation1 [shape = 'u32[144,128]{1,0:T(1,128)}', space=vmem, size = 0x12000, scoped, tag = 'internal scratch']
  %s0 = inlined_call_operand.vmem [shape: bf16[36,128], index: 0, kind: input, shape index: {}]
  %s1 = inlined_call_operand.vmem [shape: bf16[32,36], index: 1, kind: input, shape index: {}]
  %s2 = inlined_call_operand.vmem [shape: f32[32,1], index: 2, kind: input, shape index: {}]
  %s3 = inlined_call_operand.vmem [shape: bf16[8,32], index: 3, kind: input, shape index: {}]
  %s4 = inlined_call_operand.vmem [shape: f32[8,1], index: 4, kind: input, shape index: {}]
  %s5 = inlined_call_operand.hbm [shape: f32[8,128], index: 5, kind: output, shape index: {}]
  %s6 = sld [smem:[#allocation0]]
  $region30: #{tpu_custom_call.1} parent=0
    _
  %s8 = ssub.s32 1, %s6
  %s9 = scalar_select 0, %s8, %s6
  $region1: #{tpu_custom_call.1} parent=0
    #allocation2 [shape = 'u8[4096]{0}', space=vmem, size = 0x1000, scoped, tag = 'output window, operand 0, single buffered']
    #allocation3 [shape = 's32[1]{0}', space=sflag, size = 0x4, scoped, tag = 'scoped memory for tpu_custom_call.1']
    %10 = vsyncpa [#allocation3], 0
    // Predicated region
    $region2: #{tpu_custom_call.1} parent=1 // pred_check
      _
    $region3: #{tpu_custom_call.1} parent=1 // pred_check_branch
      %12 = sbr.rel (0) target = $region5
    $region4: #{tpu_custom_call.1} parent=1 // pred_region
      _
    $region5: #{tpu_custom_call.1} parent=1 // pred_fallthru
      _
    // Predicated region
    $region6: #{tpu_custom_call.1} parent=1 // pred_check
      _
    $region7: #{tpu_custom_call.1} parent=1 // pred_check_branch
      %14 = sbr.rel (0) target = $region9
    $region8: #{tpu_custom_call.1} parent=1 // pred_region
      _
    $region9: #{tpu_custom_call.1} parent=1 // pred_fallthru
      _
    // Predicated region
    $region10: #{tpu_custom_call.1} parent=1 // pred_check
      _
    $region11: #{tpu_custom_call.1} parent=1 // pred_check_branch
      %16 = sbr.rel (0) target = $region13
    $region12: #{tpu_custom_call.1} parent=1 // pred_region
      _
    $region13: #{tpu_custom_call.1} parent=1 // pred_fallthru
      _
    // Predicated region
    $region14: #{tpu_custom_call.1} parent=1 // pred_check
      _
    $region15: #{tpu_custom_call.1} parent=1 // pred_check_branch
      %18 = sbr.rel (0) target = $region17
    $region16: #{tpu_custom_call.1} parent=1 // pred_region
      _
    $region17: #{tpu_custom_call.1} parent=1 // pred_fallthru
      _
    // Predicated region
    $region18: #{tpu_custom_call.1} parent=1 // pred_check
      _
    $region19: #{tpu_custom_call.1} parent=1 // pred_check_branch
      %20 = sbr.rel (0) target = $region21
    $region20: #{tpu_custom_call.1} parent=1 // pred_region
      _
    $region21: #{tpu_custom_call.1} parent=1 // pred_fallthru
      _
    %v22 = vld [vmem:[%s1] sm:$0xf]
    %v23 = vld [vmem:[%s1 + $0x4] sm:$0xf]
    %v24 = vld [vmem:[%s1 + $0x8] sm:$0xf]
    %v25 = vld [vmem:[%s1 + $0xc] sm:$0xf]
    %v26 = vld [vmem:[%s0] sm:$0xf]
    %v27 = vld [vmem:[%s0 + $0x4] sm:$0xf]
    %v28 = vld [vmem:[%s0 + $0x8] sm:$0xf]
    %v29 = vld [vmem:[%s0 + $0xc] sm:$0xf]
    %v30 = vld [vmem:[%s0 + $0x10] sm:$0x3]
    %v31 = vld [vmem:[%s2] sm:$0xff]
    %v32 = vld [vmem:[%s2 + $0x8] sm:$0xff]
    %v33 = vld [vmem:[%s2 + $0x10] sm:$0xff]
    %v34 = vld [vmem:[%s2 + $0x18] sm:$0xff]
    %36 = vset.pattern.permute.xlu0 0
    %37 = vperm.xlu0 %36, %v31
    %v38 = vpop.permute.xlu0 %37
    %41 = vset.pattern.permute.xlu0 0
    %42 = vperm.xlu0 %41, %v32
    %v43 = vpop.permute.xlu0 %42
    %46 = vset.pattern.permute.xlu0 0
    %47 = vperm.xlu0 %46, %v33
    %v48 = vpop.permute.xlu0 %47
    %51 = vset.pattern.permute.xlu0 0
    %52 = vperm.xlu0 %51, %v34
    %v53 = vpop.permute.xlu0 %52
    %v59 = vunpack.c.l.b16 %v22
    %v60 = vunpack.c.l.b16 %v23
    %v61 = vunpack.c.l.b16 %v24
    %v62 = vunpack.c.l.b16 %v25
    %v63 = vpack.c.b16 %v60, %v59
    %v64 = vpack.c.b16 %v62, %v61
    %v70 = vunpack.c.l.b16 %v26
    %v71 = vunpack.c.l.b16 %v27
    %v72 = vunpack.c.l.b16 %v28
    %v73 = vunpack.c.l.b16 %v29
    %v74 = vunpack.c.l.b16 %v30
    %v75 = vpack.c.b16 %v71, %v70
    %v76 = vpack.c.b16 %v73, %v72
    %v77 = vpack.c.b16 %v74, %v74
    %vm80 = vcmask 293888
    %v82 = vsel %vm80, %v63, 0
    %v85 = vsel %vm80, %v64, 0
    %vm87 = vcmask 1041408
    %v89 = vsel %vm87, %v77, 0
    %91 = vmatprep.subr.bf16.mxu0 0
    %92 = vmatpush1.bf16.msra.mxu0 %v75
    %93 = vmatprep.subr.bf16.mxu0 0
    %94 = vmatpush1.bf16.msra.mxu0 %v76
    %95 = vmatprep.subr.bf16.mxu0 0
    %96 = vmatpush1.bf16.msra.mxu0 %v89
    %97 = vmatprep.subr.bf16.mxu0 0
    %98 = vmatpush1.bf16.msra.mxu0 0
    %99 = vmatprep.subr.bf16.mxu0 0
    %100 = vmatpush1.bf16.msra.mxu0 0
    %101 = vmatprep.subr.bf16.mxu0 0
    %102 = vmatpush1.bf16.msra.mxu0 0
    %103 = vmatprep.subr.bf16.mxu0 0
    %104 = vmatpush1.bf16.msra.mxu0 0
    %105 = vmatprep.subr.bf16.mxu0 0
    %106 = vmatpush1.bf16.msra.mxu0 0
    %107 = vmatprep.subr.bf16.mxu0 0
    %108 = vmatpush1.bf16.msra.mxu0 0
    %109 = vmatprep.subr.bf16.mxu0 0
    %110 = vmatpush1.bf16.msra.mxu0 0
    %111 = vmatprep.subr.bf16.mxu0 0
    %112 = vmatpush1.bf16.msra.mxu0 0
    %113 = vmatprep.subr.bf16.mxu0 0
    %114 = vmatpush1.bf16.msra.mxu0 0
    %115 = vmatprep.subr.bf16.mxu0 0
    %116 = vmatpush1.bf16.msra.mxu0 0
    %117 = vmatprep.subr.bf16.mxu0 0
    %118 = vmatpush1.bf16.msra.mxu0 0
    %119 = vmatprep.subr.bf16.mxu0 0
    %120 = vmatpush1.bf16.msra.mxu0 0
    %121 = vmatprep.subr.bf16.mxu0 0
    %122 = vmatpush1.bf16.msra.mxu0 0
    %123 = vmatprep.mubr.bf16.mxu0 0
    %124 = vmatmul.mubr.bf16.gmra.mrb[0].mxu0 %v82
    %v125 = vpop.f32.mrb[0].mxu0
    %v126 = vadd.f32 %v38, %v125
    %v127 = vpop.f32.mrb[0].mxu0
    %v128 = vpop.f32.mrb[0].mxu0
    %v129 = vadd.f32 %v43, %v128
    %v130 = vpop.f32.mrb[0].mxu0
    %131 = vmatprep.mubr.bf16.mxu0 0
    %132 = vmatmul.mubr.bf16.gmra.mrb[0].mxu0 %v85
    %v133 = vpop.f32.mrb[0].mxu0
    %v134 = vadd.f32 %v48, %v133
    %v135 = vpop.f32.mrb[0].mxu0
    %v136 = vpop.f32.mrb[0].mxu0
    %v137 = vadd.f32 %v53, %v136
    %v138 = vpop.f32.mrb[0].mxu0
    %139 = vdwg.mxu0
    %v140 = vmax.f32 %v126, 0.0
    %v141 = vmax.f32 %v129, 0.0
    %v142 = vmax.f32 %v134, 0.0
    %v143 = vmax.f32 %v137, 0.0
    %v144 = vld [vmem:[%s3] sm:$0xf]
    %v145 = vpack.c.bf16 %v141, %v140
    %v146 = vpack.c.bf16 %v143, %v142
    %v147 = vld [vmem:[%s4] sm:$0xff]
    %149 = vset.pattern.permute.xlu0 0
    %150 = vperm.xlu0 %149, %v147
    %v151 = vpop.permute.xlu0 %150
    %vm153 = vcmask 261120
    %v155 = vsel %vm153, %v144, 0
    %157 = vmatprep.subr.bf16.mxu0 0
    %158 = vmatpush1.bf16.msra.mxu0 %v145
    %159 = vmatprep.subr.bf16.mxu0 0
    %160 = vmatpush1.bf16.msra.mxu0 %v146
    %161 = vmatprep.subr.bf16.mxu0 0
    %162 = vmatpush1.bf16.msra.mxu0 0
    %163 = vmatprep.subr.bf16.mxu0 0
    %164 = vmatpush1.bf16.msra.mxu0 0
    %165 = vmatprep.subr.bf16.mxu0 0
    %166 = vmatpush1.bf16.msra.mxu0 0
    %167 = vmatprep.subr.bf16.mxu0 0
    %168 = vmatpush1.bf16.msra.mxu0 0
    %169 = vmatprep.subr.bf16.mxu0 0
    %170 = vmatpush1.bf16.msra.mxu0 0
    %171 = vmatprep.subr.bf16.mxu0 0
    %172 = vmatpush1.bf16.msra.mxu0 0
    %173 = vmatprep.subr.bf16.mxu0 0
    %174 = vmatpush1.bf16.msra.mxu0 0
    %175 = vmatprep.subr.bf16.mxu0 0
    %176 = vmatpush1.bf16.msra.mxu0 0
    %177 = vmatprep.subr.bf16.mxu0 0
    %178 = vmatpush1.bf16.msra.mxu0 0
    %179 = vmatprep.subr.bf16.mxu0 0
    %180 = vmatpush1.bf16.msra.mxu0 0
    %181 = vmatprep.subr.bf16.mxu0 0
    %182 = vmatpush1.bf16.msra.mxu0 0
    %183 = vmatprep.subr.bf16.mxu0 0
    %184 = vmatpush1.bf16.msra.mxu0 0
    %185 = vmatprep.subr.bf16.mxu0 0
    %186 = vmatpush1.bf16.msra.mxu0 0
    %187 = vmatprep.subr.bf16.mxu0 0
    %188 = vmatpush1.bf16.msra.mxu0 0
    %189 = vmatprep.mubr.bf16.mxu0 0
    %190 = vmatmul.mubr.bf16.gmra.mrb[0].mxu0 %v155
    %v191 = vpop.f32.mrb[0].mxu0
    %v192 = vadd.f32 %v151, %v191
    %v193 = vpop.f32.mrb[0].mxu0
    %v194 = vpop.f32.mrb[0].mxu0
    %v195 = vpop.f32.mrb[0].mxu0
    %196 = vdwg.mxu0
    %197 = vst [vmem:[#allocation2] sm:$0xff] %v192
    // Predicated region
    $region22: #{tpu_custom_call.1} parent=1 // pred_check
      _
    $region23: #{tpu_custom_call.1} parent=1 // pred_check_branch
      %199 = sbr.rel (0) target = $region25
    $region24: #{tpu_custom_call.1} parent=1 // pred_region
      %s201 = ssub.s32 128, 128
      %202 = vsyncadd [#allocation3], %s201
      %s204 = sshll.u32 [#allocation2], 4
      %s205 = int_to_ptr.vmem [resolvable:$true] %s204
      %207 = dma.vmem_to_hbm [thread:$0]  %s205, 128, %s5, [#allocation3]
    $region25: #{tpu_custom_call.1} parent=1 // pred_fallthru
      _
    // Predicated region
    $region26: #{tpu_custom_call.1} parent=1 // pred_check
      _
    $region27: #{tpu_custom_call.1} parent=1 // pred_check_branch
      %209 = sbr.rel (0) target = $region29
    $region28: #{tpu_custom_call.1} parent=1 // pred_region
      %210 = dma.done [#allocation3], 128
    $region29: #{tpu_custom_call.1} parent=1 // pred_fallthru
      _
    %211 = vsyncpa [#allocation3], 1

</llo_original>
